<compile_context>
chip_gen: v7x
topology: tpu7x:2x2x1
jax: 0.10.0
libtpu: 0.0.40
codegen_flags: <defaults>
</compile_context>

<pallas_src>
import functools
import math

import jax
import jax.numpy as jnp
from jax.experimental import pallas as pl
from jax.experimental.pallas import tpu as pltpu


# ----------------------------------------------------------------------------
# Per-generation hardware defaults (VMEM limit, tile sizes)
# ----------------------------------------------------------------------------
def _hw_defaults():
    kind = ""
    try:
        kind = jax.devices()[0].device_kind.lower()
    except Exception:
        pass
    vmem = None
    try:
        info = pltpu.get_tpu_info()
        v = getattr(info, "vmem_capacity_bytes", None)
        if v:
            vmem = int(v)
    except Exception:
        vmem = None
    if vmem is None:
        # v7x has 64 MiB / TensorCore, v5e/v6e have 128 MiB.
        vmem = 64 * 1024 * 1024 if "v7" in kind else 128 * 1024 * 1024
    # Leave ~25% headroom for double buffers / compiler-internal scratch.
    limit = int(vmem * 3 // 4)
    big_vmem = vmem >= 96 * 1024 * 1024
    tm = tn = 512 if big_vmem else 256
    tk = 512
    # v5e MXU is 128-wide; v6e/v7x benefit from 256-wide attention tiles.
    tq = tkv = 128 if "v5" in kind else 256
    return limit, tm, tn, tk, tq, tkv


_VMEM_LIMIT, _TM, _TN, _TK, _TQ, _TKV = _hw_defaults()


def _tile(dim, preferred):
    """Largest power-of-two tile <= preferred that divides dim (or full dim)."""
    if dim <= preferred:
        return dim
    t = 1 << (max(int(preferred), 8).bit_length() - 1)
    while t > 8 and dim % t:
        t //= 2
    # TODO(synk): pad awkward (non power-of-two-divisible) dims instead of
    # falling back to a single full-size block.
    return t if dim % t == 0 else dim


# ----------------------------------------------------------------------------
# Tiled, pipelined GEMM + bias (bf16 MXU operands, fp32 VMEM accumulator)
# ----------------------------------------------------------------------------
def _linear_kernel(x_ref, w_ref, b_ref, o_ref, acc_ref):
    @pl.when(pl.program_id(2) == 0)
    def _():
        acc_ref[...] = jnp.zeros_like(acc_ref)

    acc_ref[...] += jnp.dot(x_ref[...], w_ref[...],
                            preferred_element_type=jnp.float32)

    @pl.when(pl.program_id(2) == pl.num_programs(2) - 1)
    def _():
        o_ref[...] = (acc_ref[...] + b_ref[...].astype(jnp.float32)
                      ).astype(o_ref.dtype)


def linear(x, w, b, out_dtype=jnp.bfloat16):
    """x: [M, K], w: [K, N] (bf16), b: [N] (fp32) -> [M, N] out_dtype."""
    M, K = x.shape
    N = w.shape[1]
    tm, tn, tk = _tile(M, _TM), _tile(N, _TN), _tile(K, _TK)
    grid = (M // tm, N // tn, K // tk)
    # TODO(synk): on v5e, bump the weight BlockSpec to pipeline_mode=pl.Buffered(3)
    # if profiling shows the K-axis weight stream exposed.
    return pl.pallas_call(
        _linear_kernel,
        out_shape=jax.ShapeDtypeStruct((M, N), out_dtype),
        grid=grid,
        in_specs=[
            pl.BlockSpec((tm, tk), lambda i, j, k: (i, k)),
            pl.BlockSpec((tk, tn), lambda i, j, k: (k, j)),
            pl.BlockSpec((1, tn), lambda i, j, k: (0, j)),
        ],
        out_specs=pl.BlockSpec((tm, tn), lambda i, j, k: (i, j)),
        scratch_shapes=[pltpu.VMEM((tm, tn), jnp.float32)],
        compiler_params=pltpu.CompilerParams(
            dimension_semantics=("parallel", "parallel", "arbitrary"),
            vmem_limit_bytes=_VMEM_LIMIT),
    )(x.astype(jnp.bfloat16), w, b.reshape(1, N).astype(jnp.float32))


# ----------------------------------------------------------------------------
# Fused feed-forward, F-tiled: acc += relu(x@W1[:,f]+b1[f]) @ W2[f,:]
# (hidden never materializes in HBM; weights never fully resident in VMEM)
# ----------------------------------------------------------------------------
def _ffn_kernel(x_ref, w1_ref, b1_ref, w2_ref, b2_ref, o_ref, acc_ref):
    @pl.when(pl.program_id(1) == 0)
    def _():
        acc_ref[...] = jnp.zeros_like(acc_ref)

    h = jnp.dot(x_ref[...], w1_ref[...], preferred_element_type=jnp.float32)
    h = jnp.maximum(h + b1_ref[...].astype(jnp.float32), 0.0)
    acc_ref[...] += jnp.dot(h.astype(w2_ref.dtype), w2_ref[...],
                            preferred_element_type=jnp.float32)

    @pl.when(pl.program_id(1) == pl.num_programs(1) - 1)
    def _():
        o_ref[...] = (acc_ref[...] + b2_ref[...].astype(jnp.float32)
                      ).astype(o_ref.dtype)


def feed_forward(x, p):
    B, S, D = x.shape
    M = B * S
    F = p["w1"].shape[1]
    tm = _tile(M, _TM)
    tf = _tile(F, _TK)
    out = pl.pallas_call(
        _ffn_kernel,
        out_shape=jax.ShapeDtypeStruct((M, D), jnp.bfloat16),
        grid=(M // tm, F // tf),
        in_specs=[
            pl.BlockSpec((tm, D), lambda i, f: (i, 0)),
            pl.BlockSpec((D, tf), lambda i, f: (0, f)),
            pl.BlockSpec((1, tf), lambda i, f: (0, f)),
            pl.BlockSpec((tf, D), lambda i, f: (f, 0)),
            pl.BlockSpec((1, D), lambda i, f: (0, 0)),
        ],
        out_specs=pl.BlockSpec((tm, D), lambda i, f: (i, 0)),
        scratch_shapes=[pltpu.VMEM((tm, D), jnp.float32)],
        compiler_params=pltpu.CompilerParams(
            dimension_semantics=("parallel", "arbitrary"),
            vmem_limit_bytes=_VMEM_LIMIT),
    )(x.reshape(M, D).astype(jnp.bfloat16),
      p["w1"], p["b1"].reshape(1, F),
      p["w2"], p["b2"].reshape(1, D))
    return out.reshape(B, S, D)


# ----------------------------------------------------------------------------
# Fused residual add + LayerNorm, row-tiled (bf16 in / bf16 out, fp32 math)
# ----------------------------------------------------------------------------
def _add_ln_kernel(x_ref, r_ref, g_ref, b_ref, o_ref, *, eps):
    x = x_ref[...].astype(jnp.float32) + r_ref[...].astype(jnp.float32)
    mu = jnp.mean(x, axis=-1, keepdims=True)
    xc = x - mu
    var = jnp.mean(xc * xc, axis=-1, keepdims=True)
    y = xc * jax.lax.rsqrt(var + eps)
    o_ref[...] = (y * g_ref[...] + b_ref[...]).astype(o_ref.dtype)


def add_and_norm(x, sub, p, eps=1e-5):
    # residual dropout is identity (eval-mode forward)
    B, S, D = x.shape
    M = B * S
    tm = _tile(M, _TM)
    out = pl.pallas_call(
        functools.partial(_add_ln_kernel, eps=eps),
        out_shape=jax.ShapeDtypeStruct((M, D), jnp.bfloat16),
        grid=(M // tm,),
        in_specs=[
            pl.BlockSpec((tm, D), lambda i: (i, 0)),
            pl.BlockSpec((tm, D), lambda i: (i, 0)),
            pl.BlockSpec((1, D), lambda i: (0, 0)),
            pl.BlockSpec((1, D), lambda i: (0, 0)),
        ],
        out_specs=pl.BlockSpec((tm, D), lambda i: (i, 0)),
        compiler_params=pltpu.CompilerParams(
            dimension_semantics=("parallel",),
            vmem_limit_bytes=_VMEM_LIMIT),
    )(x.reshape(M, D), sub.reshape(M, D),
      p["g"].reshape(1, D), p["b"].reshape(1, D))
    return out.reshape(B, S, D)


# ----------------------------------------------------------------------------
# Row-tiled softmax (final vocab distribution); tile sized from V + VMEM budget
# ----------------------------------------------------------------------------
def _softmax_kernel(x_ref, o_ref):
    x = x_ref[...].astype(jnp.float32)
    m = jnp.max(x, axis=-1, keepdims=True)
    p = jnp.exp(x - m)
    l = jnp.sum(p, axis=-1, keepdims=True)
    o_ref[...] = (p * pl.reciprocal(l, approx=False)).astype(o_ref.dtype)


def softmax_rows(x):
    M, V = x.shape
    # input (bf16) + fp32 compute + fp32 output, double buffered: keep the row
    # tile small enough that ~6 * tm * V * 4 bytes stays inside the budget.
    budget_rows = max(8, _VMEM_LIMIT // (V * 4 * 6))
    tm = _tile(M, min(_TM, budget_rows))
    return pl.pallas_call(
        _softmax_kernel,
        out_shape=jax.ShapeDtypeStruct((M, V), jnp.float32),
        grid=(M // tm,),
        in_specs=[pl.BlockSpec((tm, V), lambda i: (i, 0))],
        out_specs=pl.BlockSpec((tm, V), lambda i: (i, 0)),
        compiler_params=pltpu.CompilerParams(
            dimension_semantics=("parallel",),
            vmem_limit_bytes=_VMEM_LIMIT),
    )(x)


# ----------------------------------------------------------------------------
# Flash attention: flattened (batch, block-pair) grid via scalar prefetch.
# Causal fully-masked K/V blocks are never DMA'd.  Output is written directly
# in [B, Sq, H, Dh] layout (no XLA head-merge transpose afterwards).
# 1/sqrt(Dh) is folded into W_q at init, so no scale multiply in-kernel.
# ----------------------------------------------------------------------------
def _flash_attn_kernel(qi_tbl, kv_tbl, last_tbl, q_ref, k_ref, v_ref, o_ref,
                       m_sc, l_sc, acc_sc, *, causal, tq, tkv):
    n = pl.program_id(1)
    qi_i = qi_tbl[n]
    kv_i = kv_tbl[n]

    @pl.when(kv_i == 0)
    def _():
        m_sc[...] = jnp.full_like(m_sc, -jnp.inf)
        l_sc[...] = jnp.zeros_like(l_sc)
        acc_sc[...] = jnp.zeros_like(acc_sc)

    q = q_ref[0]          # [H, tq, Dh]  bf16 (already scaled via W_q)
    k = k_ref[0]          # [H, tkv, Dh] bf16
    v = v_ref[0]          # [H, tkv, Dh] bf16
    s = jnp.einsum("hqd,hkd->hqk", q, k, preferred_element_type=jnp.float32)
    if causal:
        row = jax.lax.broadcasted_iota(jnp.int32, s.shape, 1) + qi_i * tq
        col = jax.lax.broadcasted_iota(jnp.int32, s.shape, 2) + kv_i * tkv
        s = jnp.where(col <= row, s, jnp.float32(-1e30))  # fp32-safe mask

    # TODO(synk): m/l scratch kept at (H, tq, 1) (canonical flash layout); a
    # lane-dense (H, tq) variant would reduce masked scratch stores further.
    m_prev = m_sc[...]
    m_new = jnp.maximum(m_prev, jnp.max(s, axis=-1, keepdims=True))
    alpha = jnp.exp(m_prev - m_new)
    p = jnp.exp(s - m_new)
    l_sc[...] = alpha * l_sc[...] + jnp.sum(p, axis=-1, keepdims=True)
    acc_sc[...] = alpha * acc_sc[...] + jnp.einsum(
        "hqk,hkd->hqd", p.astype(v.dtype), v, preferred_element_type=jnp.float32)
    m_sc[...] = m_new

    @pl.when(last_tbl[n] == 1)
    def _():
        out = acc_sc[...] * pl.reciprocal(l_sc[...], approx=True)   # [H, tq, Dh]
        H = out.shape[0]
        for h in range(H):  # static per-head stores: output in [tq, H, Dh] layout
            o_ref[0, :, h, :] = out[h].astype(o_ref.dtype)


def _block_tables(nq, nk, causal, tq, tkv):
    qi, kv, last = [], [], []
    for i in range(nq):
        k_hi = min(nk - 1, (i * tq + tq - 1) // tkv) if causal else nk - 1
        for j in range(k_hi + 1):
            qi.append(i)
            kv.append(j)
            last.append(1 if j == k_hi else 0)
    return (jnp.asarray(qi, jnp.int32), jnp.asarray(kv, jnp.int32),
            jnp.asarray(last, jnp.int32))


def flash_attention(q, k, v, causal):
    """q: [B, H, Sq, Dh], k/v: [B, H, Sk, Dh] -> [B, Sq, H, Dh] bf16."""
    B, H, Sq, Dh = q.shape
    Sk = k.shape[2]
    tq = _tile(Sq, _TQ)
    tkv = _tile(Sk, _TKV)
    nq, nk = Sq // tq, Sk // tkv
    qi_tbl, kv_tbl, last_tbl = _block_tables(nq, nk, causal, tq, tkv)
    grid = (B, int(qi_tbl.shape[0]))
    # TODO(synk): for v7x megacore balance with tiny batch, lead the grid with
    # the q-tile axis instead of B.
    return pl.pallas_call(
        functools.partial(_flash_attn_kernel, causal=causal, tq=tq, tkv=tkv),
        out_shape=jax.ShapeDtypeStruct((B, Sq, H, Dh), jnp.bfloat16),
        grid_spec=pltpu.PrefetchScalarGridSpec(
            num_scalar_prefetch=3,
            grid=grid,
            in_specs=[
                pl.BlockSpec((1, H, tq, Dh),
                             lambda b, n, qt, kt, lt: (b, 0, qt[n], 0)),
                pl.BlockSpec((1, H, tkv, Dh),
                             lambda b, n, qt, kt, lt: (b, 0, kt[n], 0)),
                pl.BlockSpec((1, H, tkv, Dh),
                             lambda b, n, qt, kt, lt: (b, 0, kt[n], 0)),
            ],
            out_specs=pl.BlockSpec((1, tq, H, Dh),
                                   lambda b, n, qt, kt, lt: (b, qt[n], 0, 0)),
            scratch_shapes=[
                pltpu.VMEM((H, tq, 1), jnp.float32),
                pltpu.VMEM((H, tq, 1), jnp.float32),
                pltpu.VMEM((H, tq, Dh), jnp.float32),
            ]),
        compiler_params=pltpu.CompilerParams(
            dimension_semantics=("parallel", "arbitrary"),
            vmem_limit_bytes=_VMEM_LIMIT),
    )(qi_tbl, kv_tbl, last_tbl,
      q.astype(jnp.bfloat16), k.astype(jnp.bfloat16), v.astype(jnp.bfloat16))


# ----------------------------------------------------------------------------
# Model glue (plain JAX around the Pallas hot paths)
# ----------------------------------------------------------------------------
def positional_encoding(max_len, d, base):
    pos = jnp.arange(max_len, dtype=jnp.float32)[:, None]
    i = jnp.arange(d, dtype=jnp.float32)[None, :]
    angle = pos / jnp.power(jnp.float32(base), (2.0 * jnp.floor(i / 2.0)) / d)
    return jnp.where((jnp.arange(d) % 2) == 0, jnp.sin(angle), jnp.cos(angle))


def embed_tokens(tokens, emb_table, pe):
    # TODO(synk): token gather stays in XLA (cheap relative to GEMMs).
    d = emb_table.shape[1]
    x = jnp.take(emb_table, tokens, axis=0) * math.sqrt(d)
    return (x + pe[None, : tokens.shape[1], :]).astype(jnp.bfloat16)


def multi_head_attention(x_q, x_kv, p, head_count, causal, self_attention):
    B, Sq, D = x_q.shape
    Sk = x_kv.shape[1]
    H = head_count
    Dh = D // H

    # TODO(synk): the head-split transpose of the fused QKV projection is still
    # an XLA transpose (now bf16, half the bytes); fusing it into the attention
    # BlockSpecs would need an in-kernel (tq,H,Dh)->(H,tq,Dh) relayout.
    if self_attention:
        qkv = linear(x_q.reshape(B * Sq, D), p["w_qkv"], p["b_qkv"])   # [B*Sq, 3D] bf16
        qkv = qkv.reshape(B, Sq, 3, H, Dh).transpose(2, 0, 3, 1, 4)    # [3,B,H,Sq,Dh]
        q, k, v = qkv[0], qkv[1], qkv[2]
    else:
        q = linear(x_q.reshape(B * Sq, D), p["w_q"], p["b_q"])
        kv = linear(x_kv.reshape(B * Sk, D), p["w_kv"], p["b_kv"])
        q = q.reshape(B, Sq, H, Dh).transpose(0, 2, 1, 3)              # [B,H,Sq,Dh]
        kv = kv.reshape(B, Sk, 2, H, Dh).transpose(2, 0, 3, 1, 4)      # [2,B,H,Sk,Dh]
        k, v = kv[0], kv[1]

    o = flash_attention(q, k, v, causal)        # [B, Sq, H, Dh] bf16 (merge fused)
    o = o.reshape(B * Sq, D)                    # free reshape, no transpose
    return linear(o, p["wo"], p["bo"]).reshape(B, Sq, D)


def encoder_layer(x, p, head_count):
    x = add_and_norm(
        x, multi_head_attention(x, x, p["attn"], head_count, False, True), p["ln1"])
    x = add_and_norm(x, feed_forward(x, p["ff"]), p["ln2"])
    return x


def decoder_layer(x, memory, p, head_count):
    x = add_and_norm(
        x, multi_head_attention(x, x, p["self_attn"], head_count, True, True),
        p["ln1"])
    x = add_and_norm(
        x, multi_head_attention(x, memory, p["cross_attn"], head_count, False, False),
        p["ln2"])
    x = add_and_norm(x, feed_forward(x, p["ff"]), p["ln3"])
    return x


def transformer_forward(params, source, target):
    cfg = params["cfg"]
    pe = params["pe"]
    # ----- encoder -----
    x = embed_tokens(source, params["enc_embed"], pe)
    for lp in params["enc_layers"]:
        x = encoder_layer(x, lp, cfg["enc_heads"])
    memory = x
    # ----- decoder -----
    y = embed_tokens(target, params["dec_embed"], pe)
    for lp in params["dec_layers"]:
        y = decoder_layer(y, memory, lp, cfg["dec_heads"])
    B, S, D = y.shape
    logits = linear(y.reshape(B * S, D), params["out_w"], params["out_b"])
    probs = softmax_rows(logits)
    return probs.reshape(B, S, params["out_w"].shape[1])


# ----------------------------------------------------------------------------
# Deterministic parameter init (weights pre-cast to bf16, scale folded into Wq)
# ----------------------------------------------------------------------------
def _dense(key, fan_in, fan_out):
    w = jax.random.normal(key, (fan_in, fan_out), jnp.float32) * 0.02
    b = jnp.zeros((fan_out,), jnp.float32)
    return w, b


def _mha_params(key, d, head_count, fused_qkv):
    ks = jax.random.split(key, 4)
    scale = 1.0 / math.sqrt(d // head_count)
    wq, bq = _dense(ks[0], d, d)
    wk, bk = _dense(ks[1], d, d)
    wv, bv = _dense(ks[2], d, d)
    wo, bo = _dense(ks[3], d, d)
    wq, bq = wq * scale, bq * scale          # fold 1/sqrt(Dh) into Q projection
    out = dict(wo=wo.astype(jnp.bfloat16), bo=bo)
    if fused_qkv:
        out["w_qkv"] = jnp.concatenate([wq, wk, wv], axis=1).astype(jnp.bfloat16)
        out["b_qkv"] = jnp.concatenate([bq, bk, bv])
    else:                                     # cross-attention: pre-split Q / KV
        out["w_q"] = wq.astype(jnp.bfloat16)
        out["b_q"] = bq
        out["w_kv"] = jnp.concatenate([wk, wv], axis=1).astype(jnp.bfloat16)
        out["b_kv"] = jnp.concatenate([bk, bv])
    return out


def _ln_params(d):
    return dict(g=jnp.ones((d,), jnp.float32), b=jnp.zeros((d,), jnp.float32))


def _ff_params(key, d, hidden):
    k1, k2 = jax.random.split(key)
    w1, b1 = _dense(k1, d, hidden)
    w2, b2 = _dense(k2, hidden, d)
    return dict(w1=w1.astype(jnp.bfloat16), b1=b1,
                w2=w2.astype(jnp.bfloat16), b2=b2)


def init_transformer_params(key, *, encoder_layer_count, decoder_layer_count,
                            vocab_size, d_model, max_seq_len, pe_base,
                            enc_heads, enc_ff_hidden, dec_heads, dec_ff_hidden):
    keys = jax.random.split(key, 4 + encoder_layer_count + decoder_layer_count)
    enc_embed = jax.random.normal(keys[0], (vocab_size, d_model), jnp.float32) * 0.02
    dec_embed = jax.random.normal(keys[1], (vocab_size, d_model), jnp.float32) * 0.02
    out_w, out_b = _dense(keys[2], d_model, vocab_size)

    enc_layers = []
    for l in range(encoder_layer_count):
        k_attn, k_ff = jax.random.split(keys[4 + l])
        enc_layers.append(dict(
            attn=_mha_params(k_attn, d_model, enc_heads, fused_qkv=True),
            ln1=_ln_params(d_model),
            ff=_ff_params(k_ff, d_model, enc_ff_hidden),
            ln2=_ln_params(d_model)))
    dec_layers = []
    for l in range(decoder_layer_count):
        k_sa, k_ca, k_ff = jax.random.split(keys[4 + encoder_layer_count + l], 3)
        dec_layers.append(dict(
            self_attn=_mha_params(k_sa, d_model, dec_heads, fused_qkv=True),
            ln1=_ln_params(d_model),
            cross_attn=_mha_params(k_ca, d_model, dec_heads, fused_qkv=False),
            ln2=_ln_params(d_model),
            ff=_ff_params(k_ff, d_model, dec_ff_hidden),
            ln3=_ln_params(d_model)))

    return dict(
        cfg=dict(enc_heads=enc_heads, dec_heads=dec_heads),
        pe=positional_encoding(max_seq_len, d_model, pe_base),
        enc_embed=enc_embed, dec_embed=dec_embed,
        enc_layers=enc_layers, dec_layers=dec_layers,
        out_w=out_w.astype(jnp.bfloat16), out_b=out_b,
    )


# ----------------------------------------------------------------------------
if __name__ == "__main__":
    # Small synthetic config mirroring Transformer.__init__ arguments.
    ENC_LAYERS, DEC_LAYERS = 2, 2
    VOCAB, D_MODEL = 32, 32
    MAX_SEQ, PE_BASE = 16, 10000.0
    ENC_HEADS, ENC_FF = 4, 64
    DEC_HEADS, DEC_FF = 4, 64
    B, S_SRC, S_TGT = 2, 8, 8
    # TODO(synk): dropout (residual_dropout_rate) is a no-op here (eval-mode forward).

    key = jax.random.PRNGKey(0)
    k_params, k_src, k_tgt = jax.random.split(key, 3)
    params = init_transformer_params(
        k_params,
        encoder_layer_count=ENC_LAYERS, decoder_layer_count=DEC_LAYERS,
        vocab_size=VOCAB, d_model=D_MODEL, max_seq_len=MAX_SEQ, pe_base=PE_BASE,
        enc_heads=ENC_HEADS, enc_ff_hidden=ENC_FF,
        dec_heads=DEC_HEADS, dec_ff_hidden=DEC_FF,
    )

    source = jax.random.randint(k_src, (B, S_SRC), 0, VOCAB, dtype=jnp.int32)
    target = jax.random.randint(k_tgt, (B, S_TGT), 0, VOCAB, dtype=jnp.int32)

    out = transformer_forward(params, source, target)
    out = jax.block_until_ready(out)

    assert out.shape == (B, S_TGT, VOCAB), out.shape
    assert bool(jnp.all(jnp.isfinite(out)))
    # softmax output rows should sum to ~1
    assert bool(jnp.allclose(jnp.sum(out, axis=-1), 1.0, atol=1e-4))
    print("KERNEL_OK")
</pallas_src>

<mosaic_0001>
module attributes {stable_mosaic.version = 11 : i64} {
  func.func @_linear_kernel(%arg0: i32, %arg1: i32, %arg2: i32, %arg3: memref<16x32xbf16, #tpu.memory_space<vmem>>, %arg4: memref<32x96xbf16, #tpu.memory_space<vmem>>, %arg5: memref<1x96xf32, #tpu.memory_space<vmem>>, %arg6: memref<16x96xbf16, #tpu.memory_space<vmem>>, %arg7: memref<16x96xf32, #tpu.memory_space<vmem>>) attributes {dimension_semantics = [#tpu.dimension_semantics<parallel>, #tpu.dimension_semantics<parallel>, #tpu.dimension_semantics<arbitrary>], iteration_bounds = array<i64: 1, 1, 1>, scalar_prefetch = 0 : i64, scratch_operands = 1 : i64, tpu.core_type = #tpu.core_type<tc>, window_params = [{transform_indices = @transform_0, window_bounds = array<i64: 16, 32>}, {transform_indices = @transform_1, window_bounds = array<i64: 32, 96>}, {transform_indices = @transform_2, window_bounds = array<i64: 1, 96>}, {transform_indices = @transform_3, window_bounds = array<i64: 16, 96>}]} {
    %c0_i32 = arith.constant 0 : i32
    %0 = arith.cmpi eq, %arg2, %c0_i32 : i32
    %1 = arith.extui %0 : i1 to i32
    %c0_i32_0 = arith.constant 0 : i32
    %2 = arith.cmpi ne, %1, %c0_i32_0 : i32
    scf.if %2 {
      %cst_10 = arith.constant 0.000000e+00 : f32
      %12 = vector.broadcast %cst_10 : f32 to vector<16x96xf32>
      %c0_11 = arith.constant 0 : index
      %c0_12 = arith.constant 0 : index
      %13 = vector.load %arg7[%c0_11, %c0_12] : memref<16x96xf32, #tpu.memory_space<vmem>>, vector<16x96xf32>
      tpu.vector_store %arg7[%c0_11, %c0_12], %12 {strides = array<i32>} : memref<16x96xf32, #tpu.memory_space<vmem>>, vector<16x96xf32>,
    } else {
    }
    %c0 = arith.constant 0 : index
    %c0_1 = arith.constant 0 : index
    %3 = vector.load %arg7[%c0, %c0_1] : memref<16x96xf32, #tpu.memory_space<vmem>>, vector<16x96xf32>
    %c0_2 = arith.constant 0 : index
    %c0_3 = arith.constant 0 : index
    %4 = vector.load %arg3[%c0_2, %c0_3] : memref<16x32xbf16, #tpu.memory_space<vmem>>, vector<16x32xbf16>
    %c0_4 = arith.constant 0 : index
    %c0_5 = arith.constant 0 : index
    %5 = vector.load %arg4[%c0_4, %c0_5] : memref<32x96xbf16, #tpu.memory_space<vmem>>, vector<32x96xbf16>
    %cst = arith.constant dense<0.000000e+00> : vector<16x96xf32>
    %6 = tpu.matmul %4, %5, %cst {dimension_numbers = #tpu.dot_dimension_numbers<[1], [0], [0], [1], [0, 0, 1, 1], [], []>} : vector<16x32xbf16>, vector<32x96xbf16>, vector<16x96xf32> -> vector<16x96xf32>
    %7 = arith.addf %3, %6 : vector<16x96xf32>
    %c0_6 = arith.constant 0 : index
    %c0_7 = arith.constant 0 : index
    %8 = vector.load %arg7[%c0_6, %c0_7] : memref<16x96xf32, #tpu.memory_space<vmem>>, vector<16x96xf32>
    tpu.vector_store %arg7[%c0_6, %c0_7], %7 {strides = array<i32>} : memref<16x96xf32, #tpu.memory_space<vmem>>, vector<16x96xf32>,
    %c0_i32_8 = arith.constant 0 : i32
    %9 = arith.cmpi eq, %arg2, %c0_i32_8 : i32
    %10 = arith.extui %9 : i1 to i32
    %c0_i32_9 = arith.constant 0 : i32
    %11 = arith.cmpi ne, %10, %c0_i32_9 : i32
    scf.if %11 {
      %c0_10 = arith.constant 0 : index
      %c0_11 = arith.constant 0 : index
      %12 = vector.load %arg7[%c0_10, %c0_11] : memref<16x96xf32, #tpu.memory_space<vmem>>, vector<16x96xf32>
      %c0_12 = arith.constant 0 : index
      %c0_13 = arith.constant 0 : index
      %13 = vector.load %arg5[%c0_12, %c0_13] : memref<1x96xf32, #tpu.memory_space<vmem>>, vector<1x96xf32>
      %14 = vector.broadcast %13 : vector<1x96xf32> to vector<16x96xf32>
      %15 = arith.addf %12, %14 : vector<16x96xf32>
      %16 = arith.truncf %15 : vector<16x96xf32> to vector<16x96xbf16>
      %c0_14 = arith.constant 0 : index
      %c0_15 = arith.constant 0 : index
      %17 = vector.load %arg6[%c0_14, %c0_15] : memref<16x96xbf16, #tpu.memory_space<vmem>>, vector<16x96xbf16>
      tpu.vector_store %arg6[%c0_14, %c0_15], %16 {strides = array<i32>} : memref<16x96xbf16, #tpu.memory_space<vmem>>, vector<16x96xbf16>,
    } else {
    }
    return
  }
  func.func @transform_0(%arg0: i32, %arg1: i32, %arg2: i32) -> (i32, i32) {
    %c0_i32 = arith.constant 0 : i32
    return %arg0, %arg2 : i32, i32
  }
  func.func @transform_1(%arg0: i32, %arg1: i32, %arg2: i32) -> (i32, i32) {
    %c0_i32 = arith.constant 0 : i32
    return %arg2, %arg1 : i32, i32
  }
  func.func @transform_2(%arg0: i32, %arg1: i32, %arg2: i32) -> (i32, i32) {
    %c0_i32 = arith.constant 0 : i32
    %c0_i32_0 = arith.constant 0 : i32
    return %c0_i32, %arg1 : i32, i32
  }
  func.func @transform_3(%arg0: i32, %arg1: i32, %arg2: i32) -> (i32, i32) {
    %c0_i32 = arith.constant 0 : i32
    return %arg0, %arg1 : i32, i32
  }
}

</mosaic_0001>

<llo_original>
// kernel: tpu_custom_call.1
$region0: #{tpu_custom_call.1}
  #allocation0 [shape = 'u32[]', space=smem, size = 0x4, offset = 0x4, fixed_abs, tag = 'smem constant byte address 0x4 - core index']
  #allocation1 [shape = 'u32[144,128]{1,0:T(1,128)}', space=vmem, size = 0x12000, scoped, tag = 'internal scratch']
  #allocation2 [shape = 'f32[16,96]{1,0:T(8,128)}', space=vmem, size = 0x2000, scoped, tag = 'scratch operand']
  %s0 = inlined_call_operand.hbm [shape: bf16[16,32], index: 0, kind: input, shape index: {}]
  %s1 = inlined_call_operand.hbm [shape: bf16[32,96], index: 1, kind: input, shape index: {}]
  %s2 = inlined_call_operand.hbm [shape: f32[1,96], index: 2, kind: input, shape index: {}]
  %s3 = inlined_call_operand.hbm [shape: bf16[16,96], index: 3, kind: output, shape index: {}]
  %s4 = sld [smem:[#allocation0]]
  $region42: #{tpu_custom_call.1} parent=0
    _
  %s6 = ssub.s32 1, %s4
  %s7 = scalar_select 0, %s6, %s4
  $region1: #{tpu_custom_call.1} parent=0
    #allocation3 [shape = 'u8[4096]{0}', space=vmem, size = 0x1000, scoped, tag = 'input window, operand 0, single buffered']
    #allocation4 [shape = 's32[1]{0}', space=sflag, size = 0x4, scoped, tag = 'scoped memory for tpu_custom_call.1']
    #allocation5 [shape = 's32[1]{0}', space=sflag, size = 0x4, scoped, tag = 'scoped memory for tpu_custom_call.1']
    #allocation6 [shape = 'u8[8192]{0}', space=vmem, size = 0x2000, scoped, tag = 'input window, operand 1, single buffered']
    #allocation7 [shape = 's32[1]{0}', space=sflag, size = 0x4, scoped, tag = 'scoped memory for tpu_custom_call.1']
    #allocation8 [shape = 'u8[512]{0}', space=vmem, size = 0x400, scoped, tag = 'input window, operand 2, single buffered']
    #allocation9 [shape = 'u8[4096]{0}', space=vmem, size = 0x1000, scoped, tag = 'output window, operand 0, single buffered']
    %8 = vsyncpa [#allocation4], 0
    %9 = vsyncpa [#allocation7], 0
    %10 = vsyncpa [#allocation5], 0
    // Predicated region
    $region2: #{tpu_custom_call.1} parent=1 // pred_check
      _
    $region3: #{tpu_custom_call.1} parent=1 // pred_check_branch
      %12 = sbr.rel (0) target = $region5
    $region4: #{tpu_custom_call.1} parent=1 // pred_region
      %s14 = ssub.s32 128, 128
      %15 = vsyncadd [#allocation4], %s14
      %s16 = sshll.u32 [#allocation3], 4
      %s17 = int_to_ptr.vmem [resolvable:$true] %s16
      %22 = dma.hbm_to_vmem [thread:$0]  %s0, 128, %s17, [#allocation4], 64, 64, 4
    $region5: #{tpu_custom_call.1} parent=1 // pred_fallthru
      _
    // Predicated region
    $region6: #{tpu_custom_call.1} parent=1 // pred_check
      _
    $region7: #{tpu_custom_call.1} parent=1 // pred_check_branch
      %24 = sbr.rel (0) target = $region9
    $region8: #{tpu_custom_call.1} parent=1 // pred_region
      %s26 = ssub.s32 256, 256
      %27 = vsyncadd [#allocation7], %s26
      %s28 = sshll.u32 [#allocation6], 4
      %s29 = int_to_ptr.vmem [resolvable:$true] %s28
      %34 = dma.hbm_to_vmem [thread:$0]  %s1, 256, %s29, [#allocation7], 64, 64, 4
    $region9: #{tpu_custom_call.1} parent=1 // pred_fallthru
      _
    // Predicated region
    $region10: #{tpu_custom_call.1} parent=1 // pred_check
      _
    $region11: #{tpu_custom_call.1} parent=1 // pred_check_branch
      %36 = sbr.rel (0) target = $region13
    $region12: #{tpu_custom_call.1} parent=1 // pred_region
      %s38 = ssub.s32 16, 16
      %39 = vsyncadd [#allocation7], %s38
      %s41 = sshll.u32 [#allocation8], 4
      %s42 = int_to_ptr.vmem [resolvable:$true] %s41
      %44 = dma.hbm_to_vmem [thread:$0]  %s2, 16, %s42, [#allocation7]
    $region13: #{tpu_custom_call.1} parent=1 // pred_fallthru
      _
    // Predicated region
    $region14: #{tpu_custom_call.1} parent=1 // pred_check
      _
    $region15: #{tpu_custom_call.1} parent=1 // pred_check_branch
      %46 = sbr.rel (0) target = $region17
    $region16: #{tpu_custom_call.1} parent=1 // pred_region
      %47 = dma.done [#allocation4], 128
    $region17: #{tpu_custom_call.1} parent=1 // pred_fallthru
      _
    // Predicated region
    $region18: #{tpu_custom_call.1} parent=1 // pred_check
      _
    $region19: #{tpu_custom_call.1} parent=1 // pred_check_branch
      %49 = sbr.rel (0) target = $region21
    $region20: #{tpu_custom_call.1} parent=1 // pred_region
      %50 = dma.done [#allocation7], 256
    $region21: #{tpu_custom_call.1} parent=1 // pred_fallthru
      _
    // Predicated region
    $region22: #{tpu_custom_call.1} parent=1 // pred_check
      _
    $region23: #{tpu_custom_call.1} parent=1 // pred_check_branch
      %52 = sbr.rel (0) target = $region25
    $region24: #{tpu_custom_call.1} parent=1 // pred_region
      %53 = dma.done [#allocation7], 16
    $region25: #{tpu_custom_call.1} parent=1 // pred_fallthru
      _
    %p55 = scmp.eq.s32.totalorder 0, 0
    // Predicated region
    $region26: #{tpu_custom_call.1} parent=1 // pred_check
      %p56 = pneg %p55
    $region27: #{tpu_custom_call.1} parent=1 // pred_check_branch
      %58 = sbr.rel (%p56) target = $region29
    $region28: #{tpu_custom_call.1} parent=1 // pred_region
      %vm59 = vcmask 785408
      %60 = vst.msk [vmem:[#allocation2] sm:$0xff] %vm59, 0.0
      %61 = vst.msk [vmem:[#allocation2 + $0x8] sm:$0xff] %vm59, 0.0
    $region29: #{tpu_custom_call.1} parent=1 // pred_fallthru
      _
    %v62 = vld [vmem:[#allocation2] sm:$0xff]
    %v63 = vld [vmem:[#allocation2 + $0x8] sm:$0xff]
    %v64 = vld [vmem:[#allocation3] sm:$0xf]
    %v65 = vld [vmem:[#allocation3 + $0x4] sm:$0xf]
    %v66 = vld [vmem:[#allocation6] sm:$0xf]
    %v67 = vld [vmem:[#allocation6 + $0x4] sm:$0xf]
    %v68 = vld [vmem:[#allocation6 + $0x8] sm:$0xf]
    %v69 = vld [vmem:[#allocation6 + $0xc] sm:$0xf]
    %v72 = vunpack.c.l.b16 %v64
    %v73 = vunpack.c.l.b16 %v65
    %v74 = vpack.c.b16 %v73, %v72
    %v79 = vunpack.c.l.b16 %v66
    %v80 = vunpack.c.l.b16 %v67
    %v81 = vunpack.c.l.b16 %v68
    %v82 = vunpack.c.l.b16 %v69
    %v83 = vpack.c.b16 %v80, %v79
    %v84 = vpack.c.b16 %v82, %v81
    %vm87 = vcmask 261120
    %v89 = vsel %vm87, %v74, 0
    %91 = vmatprep.subr.bf16.mxu0 0
    %92 = vmatpush1.bf16.msra.mxu0 %v83
    %93 = vmatprep.subr.bf16.mxu0 0
    %94 = vmatpush1.bf16.msra.mxu0 %v84
    %95 = vmatprep.subr.bf16.mxu0 0
    %96 = vmatpush1.bf16.msra.mxu0 0
    %97 = vmatprep.subr.bf16.mxu0 0
    %98 = vmatpush1.bf16.msra.mxu0 0
    %99 = vmatprep.subr.bf16.mxu0 0
    %100 = vmatpush1.bf16.msra.mxu0 0
    %101 = vmatprep.subr.bf16.mxu0 0
    %102 = vmatpush1.bf16.msra.mxu0 0
    %103 = vmatprep.subr.bf16.mxu0 0
    %104 = vmatpush1.bf16.msra.mxu0 0
    %105 = vmatprep.subr.bf16.mxu0 0
    %106 = vmatpush1.bf16.msra.mxu0 0
    %107 = vmatprep.subr.bf16.mxu0 0
    %108 = vmatpush1.bf16.msra.mxu0 0
    %109 = vmatprep.subr.bf16.mxu0 0
    %110 = vmatpush1.bf16.msra.mxu0 0
    %111 = vmatprep.subr.bf16.mxu0 0
    %112 = vmatpush1.bf16.msra.mxu0 0
    %113 = vmatprep.subr.bf16.mxu0 0
    %114 = vmatpush1.bf16.msra.mxu0 0
    %115 = vmatprep.subr.bf16.mxu0 0
    %116 = vmatpush1.bf16.msra.mxu0 0
    %117 = vmatprep.subr.bf16.mxu0 0
    %118 = vmatpush1.bf16.msra.mxu0 0
    %119 = vmatprep.subr.bf16.mxu0 0
    %120 = vmatpush1.bf16.msra.mxu0 0
    %121 = vmatprep.subr.bf16.mxu0 0
    %122 = vmatpush1.bf16.msra.mxu0 0
    %123 = vmatprep.mubr.bf16.mxu0 0
    %124 = vmatmul.mubr.bf16.gmra.mrb[0].mxu0 %v89
    %v125 = vpop.f32.mrb[0].mxu0
    %v126 = vadd.f32 0.0, %v125
    %v127 = vpop.f32.mrb[0].mxu0
    %v128 = vpop.f32.mrb[0].mxu0
    %v129 = vadd.f32 0.0, %v128
    %v130 = vpop.f32.mrb[0].mxu0
    %131 = vdwg.mxu0
    %v132 = vadd.f32 %v62, %v126
    %v133 = vadd.f32 %v63, %v129
    %vm134 = vcmask 785408
    %135 = vst.msk [vmem:[#allocation2] sm:$0xff] %vm134, %v132
    %136 = vst.msk [vmem:[#allocation2 + $0x8] sm:$0xff] %vm134, %v133
    // Predicated region
    $region30: #{tpu_custom_call.1} parent=1 // pred_check
      %p137 = pneg %p55
    $region31: #{tpu_custom_call.1} parent=1 // pred_check_branch
      %139 = sbr.rel (%p137) target = $region33
    $region32: #{tpu_custom_call.1} parent=1 // pred_region
      %v140 = vld [vmem:[#allocation2] sm:$0xff]
      %v141 = vld [vmem:[#allocation2 + $0x8] sm:$0xff]
      %v142 = vld [vmem:[#allocation8] sm:$0x1]
      %v144 = vlaneseq
      %v145 = vshrl.u32 %v144, 7
      %v146 = vsub.s32 0, %v145
      %v147 = vrot.slane %v142, %v146
      %v149 = vadd.f32 %v140, %v147
      %v150 = vadd.f32 %v141, %v147
      %v151 = vpack.c.bf16 %v150, %v149
      %v153 = vunpack.c.l.b16 %v151
      %v154 = vunpack.c.h.b16 %v151
      %v155 = vpack.c.b16 %v153, %v153
      %v156 = vpack.c.b16 %v154, %v154
      %vm159 = vcmask 781312
      %160 = vst.msk [vmem:[#allocation9] sm:$0xf] %vm159, %v155
      %161 = vst.msk [vmem:[#allocation9 + $0x4] sm:$0xf] %vm159, %v156
    $region33: #{tpu_custom_call.1} parent=1 // pred_fallthru
      _
    // Predicated region
    $region34: #{tpu_custom_call.1} parent=1 // pred_check
      _
    $region35: #{tpu_custom_call.1} parent=1 // pred_check_branch
      %163 = sbr.rel (0) target = $region37
    $region36: #{tpu_custom_call.1} parent=1 // pred_region
      %s165 = ssub.s32 128, 128
      %166 = vsyncadd [#allocation5], %s165
      %s167 = sshll.u32 [#allocation9], 4
      %s168 = int_to_ptr.vmem [resolvable:$true] %s167
      %173 = dma.vmem_to_hbm [thread:$0]  %s168, 128, %s3, [#allocation5], 64, 64, 4
    $region37: #{tpu_custom_call.1} parent=1 // pred_fallthru
      _
    // Predicated region
    $region38: #{tpu_custom_call.1} parent=1 // pred_check
      _
    $region39: #{tpu_custom_call.1} parent=1 // pred_check_branch
      %175 = sbr.rel (0) target = $region41
    $region40: #{tpu_custom_call.1} parent=1 // pred_region
      %176 = dma.done [#allocation5], 128
    $region41: #{tpu_custom_call.1} parent=1 // pred_fallthru
      _
    %177 = vsyncpa [#allocation4], 1
    %178 = vsyncpa [#allocation7], 1
    %179 = vsyncpa [#allocation5], 1

</llo_original>
